<compile_context>
chip_gen: v5e
topology: v5e:2x2
jax: 0.10.0
libtpu: 0.0.40
codegen_flags: <defaults>
</compile_context>

<pallas_src>
import functools

import jax
import jax.numpy as jnp
import numpy as np
from jax.experimental import pallas as pl
from jax.experimental.pallas import tpu as pltpu


# --------------------------- Stage 1: zw = z @ W ----------------------------
def _zw_kernel(z_ref, w_ref, zw_ref):
    # z_ref: (tzm, D) row tile of z;  w_ref: (D, D);  zw_ref: (tzm, D) output.
    zw_ref[...] = jnp.dot(
        z_ref[...], w_ref[...], preferred_element_type=jnp.float32
    ).astype(zw_ref.dtype)


# ---------------------- Stage 2: out = sigmoid(zw @ z.T) --------------------
def _decode_kernel(zw_ref, z_col_ref, out_ref):
    # zw_ref:    (tm, D) row tile of z@W
    # z_col_ref: (tn, D) column tile of z (right-hand factor, un-transposed)
    # out_ref:   (tm, tn) output tile
    # (tm, D) x (tn, D) contracting on D -> (tm, tn).  MXU-native, no .T.
    s = jax.lax.dot_general(
        zw_ref[...],
        z_col_ref[...],
        dimension_numbers=(((1,), (1,)), ((), ())),
        preferred_element_type=jnp.float32,
    )
    # Sigmoid in f32 (v5e VPU/EUP have no bf16); cast only at the store.
    out_ref[...] = jax.nn.sigmoid(s).astype(out_ref.dtype)


def _vmem_cap_bytes() -> int:
    """Generation-aware scoped-VMEM budget (~70% of physical VMEM)."""
    try:
        cap = int(pltpu.get_tpu_info().vmem_capacity_bytes)
    except Exception:
        cap = 64 * 1024 * 1024  # conservative fallback (v7x per-TC VMEM)
    return int(0.7 * cap)


@functools.partial(
    jax.jit, static_argnames=("tm", "tn", "out_dtype", "compute_dtype")
)
def bilinear_decode(
    z: jax.Array,
    w: jax.Array,
    *,
    tm: int = 512,
    tn: int = 1024,
    out_dtype=None,
    compute_dtype=None,
) -> jax.Array:
    """sigmoid(z @ w @ z.T) via tiled Pallas TPU kernels.

    z: (N, D), w: (D, D).  Returns (N, N) in `out_dtype` (default: the dtype of
    the *original* z, i.e. f32 output even when compute_dtype=bf16, for parity
    with the PyTorch reference).  `compute_dtype` (e.g. jnp.bfloat16) casts z/w
    before the matmuls; MXU accumulation stays f32 via preferred_element_type.
    """
    N, D = z.shape
    assert w.shape == (D, D)
    out_dtype = z.dtype if out_dtype is None else out_dtype
    if compute_dtype is not None:
        z = z.astype(compute_dtype)
        w = w.astype(compute_dtype)
    cdt = z.dtype
    esz = jnp.dtype(cdt).itemsize
    osz = jnp.dtype(out_dtype).itemsize

    vmem_cap = _vmem_cap_bytes()

    # ---- Stage 1: zw = z @ W (row-tiled; W resident per grid step) ----------
    # TODO(synk): for very large D (W no longer fits double-buffered in VMEM),
    # add a K-tiling grid axis over D; typical z_dimension here is small.
    tzm = N if N <= 512 else 512  # 512 % 8 == 0; partial edge block is masked

    def _zw_bytes(tzm_):
        return 2 * (2 * tzm_ * D * esz + D * D * esz)

    while _zw_bytes(tzm) > vmem_cap and tzm >= 16 and tzm % 16 == 0:
        tzm //= 2

    zw = pl.pallas_call(
        _zw_kernel,
        out_shape=jax.ShapeDtypeStruct((N, D), cdt),
        grid_spec=pltpu.PrefetchScalarGridSpec(
            num_scalar_prefetch=0,
            grid=(pl.cdiv(N, tzm),),
            in_specs=[
                pl.BlockSpec((tzm, D), lambda i: (i, 0)),
                pl.BlockSpec((D, D), lambda i: (0, 0)),
            ],
            out_specs=pl.BlockSpec((tzm, D), lambda i: (i, 0)),
        ),
        compiler_params=pltpu.CompilerParams(
            dimension_semantics=("parallel",),
            vmem_limit_bytes=vmem_cap,
        ),
    )(z, w)

    # ---- Stage 2: out = sigmoid(zw @ z.T) over a 2-D output grid ------------
    tm_eff = N if N <= tm else tm  # tm multiple of 8
    tn_eff = N if N <= tn else tn  # tn multiple of 128 (lane-dense output)

    def _tile_bytes(tm_, tn_):
        # double-buffered zw row tile + z col tile + output tile
        return 2 * (tm_ * D * esz + tn_ * D * esz + tm_ * tn_ * osz)

    # Shrink tiles only while they stay (8,128)-legal multiples (full-extent
    # blocks for small N are never shrunk).
    while _tile_bytes(tm_eff, tn_eff) > vmem_cap and tn_eff >= 256 and tn_eff % 256 == 0:
        tn_eff //= 2
    while _tile_bytes(tm_eff, tn_eff) > vmem_cap and tm_eff >= 16 and tm_eff % 16 == 0:
        tm_eff //= 2

    grid = (pl.cdiv(N, tm_eff), pl.cdiv(N, tn_eff))

    out = pl.pallas_call(
        _decode_kernel,
        out_shape=jax.ShapeDtypeStruct((N, N), out_dtype),
        grid_spec=pltpu.PrefetchScalarGridSpec(
            num_scalar_prefetch=0,
            grid=grid,
            in_specs=[
                # row tile of zw: depends only on the row-tile index i
                pl.BlockSpec((tm_eff, D), lambda i, j: (i, 0)),
                # column tile of z (right-hand factor, un-transposed)
                pl.BlockSpec((tn_eff, D), lambda i, j: (j, 0)),
            ],
            out_specs=pl.BlockSpec((tm_eff, tn_eff), lambda i, j: (i, j)),
        ),
        compiler_params=pltpu.CompilerParams(
            # No cross-step carry -> both output axes independent -> shard
            # across TensorCores on v7x.
            dimension_semantics=("parallel", "parallel"),
            vmem_limit_bytes=vmem_cap,
        ),
    )(zw, z)
    return out


def glorot_init(key, input_dim, output_dim):
    # Mirrors the PyTorch glorot_init: uniform in [-r, r], r = sqrt(6/(in+out))
    init_range = np.sqrt(6.0 / (input_dim + output_dim))
    return jax.random.uniform(
        key,
        (input_dim, output_dim),
        dtype=jnp.float32,
        minval=-init_range,
        maxval=init_range,
    )


if __name__ == "__main__":
    key = jax.random.PRNGKey(0)
    k_z, k_w, k_z2, k_w2, k_z3 = jax.random.split(key, 5)

    # --- small demo shapes consistent with the module ------------------------
    N, D = 16, 32
    z = jax.random.normal(k_z, (N, D), dtype=jnp.float32)
    w = glorot_init(k_w, D, D)

    out = jax.block_until_ready(bilinear_decode(z, w))
    ref = jax.nn.sigmoid(z @ w @ z.T)
    np.testing.assert_allclose(
        np.asarray(out), np.asarray(ref), rtol=1e-5, atol=1e-5
    )

    # --- exercise the tiled (2-D grid) path with a modest size ----------------
    N2, D2 = 1024, 64
    z2 = jax.random.normal(k_z2, (N2, D2), dtype=jnp.float32)
    w2 = glorot_init(k_w2, D2, D2)

    out2 = jax.block_until_ready(bilinear_decode(z2, w2))
    ref2 = jax.nn.sigmoid(z2 @ w2 @ z2.T)
    np.testing.assert_allclose(
        np.asarray(out2), np.asarray(ref2), rtol=1e-5, atol=1e-5
    )

    # --- ragged path: N not a multiple of the row tile (masked edge blocks) ---
    N3, D3 = 600, 64
    z3 = jax.random.normal(k_z3, (N3, D3), dtype=jnp.float32)
    w3 = glorot_init(k_w, D3, D3)

    out3 = jax.block_until_ready(bilinear_decode(z3, w3))
    ref3 = jax.nn.sigmoid(z3 @ w3 @ z3.T)
    np.testing.assert_allclose(
        np.asarray(out3), np.asarray(ref3), rtol=1e-5, atol=1e-5
    )

    print("KERNEL_OK")
</pallas_src>

<mosaic_0001>
module attributes {stable_mosaic.version = 11 : i64} {
  func.func @_decode_kernel(%arg0: i32, %arg1: i32, %arg2: memref<16x32xf32, #tpu.memory_space<vmem>>, %arg3: memref<16x32xf32, #tpu.memory_space<vmem>>, %arg4: memref<16x16xf32, #tpu.memory_space<vmem>>) attributes {dimension_semantics = [#tpu.dimension_semantics<parallel>, #tpu.dimension_semantics<parallel>], iteration_bounds = array<i64: 1, 1>, scalar_prefetch = 0 : i64, scratch_operands = 0 : i64, tpu.core_type = #tpu.core_type<tc>, window_params = [{transform_indices = @transform_0, window_bounds = array<i64: 16, 32>}, {transform_indices = @transform_1, window_bounds = array<i64: 16, 32>}, {transform_indices = @transform_2, window_bounds = array<i64: 16, 16>}]} {
    %c0 = arith.constant 0 : index
    %c0_0 = arith.constant 0 : index
    %0 = vector.load %arg2[%c0, %c0_0] : memref<16x32xf32, #tpu.memory_space<vmem>>, vector<16x32xf32>
    %c0_1 = arith.constant 0 : index
    %c0_2 = arith.constant 0 : index
    %1 = vector.load %arg3[%c0_1, %c0_2] : memref<16x32xf32, #tpu.memory_space<vmem>>, vector<16x32xf32>
    %cst = arith.constant dense<0.000000e+00> : vector<16x16xf32>
    %2 = tpu.matmul %0, %1, %cst {dimension_numbers = #tpu.dot_dimension_numbers<[1], [1], [0], [0], [0, 0, 1, 0], [], []>} : vector<16x32xf32>, vector<16x32xf32>, vector<16x16xf32> -> vector<16x16xf32>
    %3 = arith.negf %2 : vector<16x16xf32>
    %4 = math.exp %3 : vector<16x16xf32>
    %cst_3 = arith.constant 1.000000e+00 : f32
    %5 = vector.broadcast %cst_3 : f32 to vector<16x16xf32>
    %6 = arith.addf %5, %4 : vector<16x16xf32>
    %7 = arith.divf %5, %6 : vector<16x16xf32>
    %c0_4 = arith.constant 0 : index
    %c0_5 = arith.constant 0 : index
    %8 = vector.load %arg4[%c0_4, %c0_5] : memref<16x16xf32, #tpu.memory_space<vmem>>, vector<16x16xf32>
    tpu.vector_store %arg4[%c0_4, %c0_5], %7 {strides = array<i32>} : memref<16x16xf32, #tpu.memory_space<vmem>>, vector<16x16xf32>,
    return
  }
  func.func @transform_0(%arg0: i32, %arg1: i32) -> (i32, i32) {
    %c0_i32 = arith.constant 0 : i32
    %c0_i32_0 = arith.constant 0 : i32
    return %arg0, %c0_i32 : i32, i32
  }
  func.func @transform_1(%arg0: i32, %arg1: i32) -> (i32, i32) {
    %c0_i32 = arith.constant 0 : i32
    %c0_i32_0 = arith.constant 0 : i32
    return %arg1, %c0_i32 : i32, i32
  }
  func.func @transform_2(%arg0: i32, %arg1: i32) -> (i32, i32) {
    %c0_i32 = arith.constant 0 : i32
    return %arg0, %arg1 : i32, i32
  }
}

module attributes {stable_mosaic.version = 11 : i64} {
  func.func @_zw_kernel(%arg0: i32, %arg1: memref<16x32xf32, #tpu.memory_space<vmem>>, %arg2: memref<32x32xf32, #tpu.memory_space<vmem>>, %arg3: memref<16x32xf32, #tpu.memory_space<vmem>>) attributes {dimension_semantics = [#tpu.dimension_semantics<parallel>], iteration_bounds = array<i64: 1>, scalar_prefetch = 0 : i64, scratch_operands = 0 : i64, tpu.core_type = #tpu.core_type<tc>, window_params = [{transform_indices = @transform_0, window_bounds = array<i64: 16, 32>}, {pipeline_mode = #tpu.pipeline_mode<synchronous>, transform_indices = @transform_1, window_bounds = array<i64: 32, 32>}, {transform_indices = @transform_2, window_bounds = array<i64: 16, 32>}]} {
    %c0 = arith.constant 0 : index
    %c0_0 = arith.constant 0 : index
    %0 = vector.load %arg1[%c0, %c0_0] : memref<16x32xf32, #tpu.memory_space<vmem>>, vector<16x32xf32>
    %c0_1 = arith.constant 0 : index
    %c0_2 = arith.constant 0 : index
    %1 = vector.load %arg2[%c0_1, %c0_2] : memref<32x32xf32, #tpu.memory_space<vmem>>, vector<32x32xf32>
    %cst = arith.constant dense<0.000000e+00> : vector<16x32xf32>
    %2 = tpu.matmul %0, %1, %cst {dimension_numbers = #tpu.dot_dimension_numbers<[1], [0], [0], [1], [0, 0, 1, 1], [], []>} : vector<16x32xf32>, vector<32x32xf32>, vector<16x32xf32> -> vector<16x32xf32>
    %c0_3 = arith.constant 0 : index
    %c0_4 = arith.constant 0 : index
    %3 = vector.load %arg3[%c0_3, %c0_4] : memref<16x32xf32, #tpu.memory_space<vmem>>, vector<16x32xf32>
    tpu.vector_store %arg3[%c0_3, %c0_4], %2 {strides = array<i32>} : memref<16x32xf32, #tpu.memory_space<vmem>>, vector<16x32xf32>,
    return
  }
  func.func @transform_0(%arg0: i32) -> (i32, i32) {
    %c0_i32 = arith.constant 0 : i32
    %c0_i32_0 = arith.constant 0 : i32
    return %arg0, %c0_i32 : i32, i32
  }
  func.func @transform_1(%arg0: i32) -> (i32, i32) {
    %c0_i32 = arith.constant 0 : i32
    %c0_i32_0 = arith.constant 0 : i32
    %c0_i32_1 = arith.constant 0 : i32
    return %c0_i32, %c0_i32_0 : i32, i32
  }
  func.func @transform_2(%arg0: i32) -> (i32, i32) {
    %c0_i32 = arith.constant 0 : i32
    %c0_i32_0 = arith.constant 0 : i32
    return %arg0, %c0_i32 : i32, i32
  }
}

</mosaic_0001>

<llo_original>
// kernel: bilinear_decode.2
$region0: #{bilinear_decode.2}
  #allocation0 [shape = 'u32[]', space=smem, size = 0x4, offset = 0x4, fixed_abs, tag = 'smem constant byte address 0x4 - core index']
  #allocation1 [shape = 'u32[72,128]{1,0:T(1,128)}', space=vmem, size = 0x9000, scoped, tag = 'internal scratch']
  %s0 = inlined_call_operand.hbm [shape: f32[16,32], index: 0, kind: input, shape index: {}]
  %s1 = inlined_call_operand.hbm [shape: f32[32,32], index: 1, kind: input, shape index: {}]
  %s2 = inlined_call_operand.vmem [shape: f32[16,32], index: 2, kind: output, shape index: {}]
  %s3 = sld [smem:[#allocation0]]
  $region26: #{bilinear_decode.2} parent=0
    _
  %s5 = ssub.s32 1, %s3
  %s6 = scalar_select 0, %s5, %s3
  $region1: #{bilinear_decode.2} parent=0
    #allocation2 [shape = 'u8[8192]{0}', space=vmem, size = 0x2000, scoped, tag = 'input window, operand 0, single buffered']
    #allocation3 [shape = 's32[1]{0}', space=sflag, size = 0x4, scoped, tag = 'scoped memory for bilinear_decode.2']
    #allocation4 [shape = 'u8[16384]{0}', space=vmem, size = 0x4000, scoped, tag = 'input window, operand 1, single buffered']
    #allocation5 [shape = 's32[1]{0}', space=sflag, size = 0x4, scoped, tag = 'scoped memory for bilinear_decode.2']
    %7 = vsyncpa [#allocation3], 0
    %8 = vsyncpa [#allocation5], 0
    // Predicated region
    $region2: #{bilinear_decode.2} parent=1 // pred_check
      _
    $region3: #{bilinear_decode.2} parent=1 // pred_check_branch
      %10 = sbr.rel (0) target = $region5
    $region4: #{bilinear_decode.2} parent=1 // pred_region
      %12 = vsyncadd [#allocation3], 0
      %s13 = sshll.u32 %s0, 4
      %s14 = int_to_ptr.hbm [resolvable:$true] %s13
      %s15 = sshll.u32 [#allocation2], 4
      %s16 = int_to_ptr.vmem [resolvable:$true] %s15
      %21 = dma.hbm_to_vmem [thread:$0]  %s14, 256, %s16, [#allocation3], 128, 128, 8
    $region5: #{bilinear_decode.2} parent=1 // pred_fallthru
      _
    // Predicated region
    $region6: #{bilinear_decode.2} parent=1 // pred_check
      _
    $region7: #{bilinear_decode.2} parent=1 // pred_check_branch
      %23 = sbr.rel (0) target = $region9
    $region8: #{bilinear_decode.2} parent=1 // pred_region
      %25 = vsyncadd [#allocation5], 0
      %s26 = sshll.u32 %s1, 4
      %s27 = int_to_ptr.hbm [resolvable:$true] %s26
      %s28 = sshll.u32 [#allocation4], 4
      %s29 = int_to_ptr.vmem [resolvable:$true] %s28
      %34 = dma.hbm_to_vmem [thread:$0]  %s27, 512, %s29, [#allocation5], 128, 128, 8
    $region9: #{bilinear_decode.2} parent=1 // pred_fallthru
      _
    // Predicated region
    $region10: #{bilinear_decode.2} parent=1 // pred_check
      _
    $region11: #{bilinear_decode.2} parent=1 // pred_check_branch
      %36 = sbr.rel (0) target = $region13
    $region12: #{bilinear_decode.2} parent=1 // pred_region
      %38 = dma.done [#allocation3], 256
    $region13: #{bilinear_decode.2} parent=1 // pred_fallthru
      _
    // Predicated region
    $region14: #{bilinear_decode.2} parent=1 // pred_check
      _
    $region15: #{bilinear_decode.2} parent=1 // pred_check_branch
      %40 = sbr.rel (0) target = $region17
    $region16: #{bilinear_decode.2} parent=1 // pred_region
      %42 = dma.done [#allocation5], 512
    $region17: #{bilinear_decode.2} parent=1 // pred_fallthru
      _
    %v43 = vld [vmem:[#allocation2] sm:$0xff]
    %v44 = vld [vmem:[#allocation2 + $0x8] sm:$0xff]
    %v45 = vld [vmem:[#allocation4] sm:$0xff]
    %v46 = vld [vmem:[#allocation4 + $0x8] sm:$0xff]
    %v47 = vld [vmem:[#allocation4 + $0x10] sm:$0xff]
    %v48 = vld [vmem:[#allocation4 + $0x18] sm:$0xff]
    %vm49 = vcmask 261120
    %v51 = vsel %vm49, %v43, 0
    %v54 = vsel %vm49, %v44, 0
    %56 = vmatpush.msra.mxu0 0.0
    %57 = vmatpush.msra.mxu0 0.0
    %58 = vmatpush.msra.mxu0 0.0
    %59 = vmatpush.msra.mxu0 0.0
    %60 = vmatpush.msra.mxu0 0.0
    %61 = vmatpush.msra.mxu0 0.0
    %62 = vmatpush.msra.mxu0 0.0
    %63 = vmatpush.msra.mxu0 0.0
    %64 = vmatpush.msra.mxu0 0.0
    %65 = vmatpush.msra.mxu0 0.0
    %66 = vmatpush.msra.mxu0 0.0
    %67 = vmatpush.msra.mxu0 0.0
    %68 = vmatpush.msra.mxu0 %v48
    %69 = vmatpush.msra.mxu0 %v47
    %70 = vmatpush.msra.mxu0 %v46
    %71 = vmatpush.msra.mxu0 %v45
    %72 = vmatmul.f32.gmra.mxu0 %v51
    %v73 = vpop.f32.mrf.mxu0
    %v74 = vadd.f32 0.0, %v73
    %75 = vmatmul.f32.gmra.mxu0 %v54
    %v76 = vpop.f32.mrf.mxu0
    %v77 = vadd.f32 0.0, %v76
    %78 = vdwg.mxu0
    %79 = vst.msk [vmem:[%s2] sm:$0xff] %vm49, %v74
    %80 = vst.msk [vmem:[%s2 + $0x8] sm:$0xff] %vm49, %v77
    // Predicated region
    $region18: #{bilinear_decode.2} parent=1 // pred_check
      _
    $region19: #{bilinear_decode.2} parent=1 // pred_check_branch
      %82 = sbr.rel (0) target = $region21
    $region20: #{bilinear_decode.2} parent=1 // pred_region
      _
    $region21: #{bilinear_decode.2} parent=1 // pred_fallthru
      _
    // Predicated region
    $region22: #{bilinear_decode.2} parent=1 // pred_check
      _
    $region23: #{bilinear_decode.2} parent=1 // pred_check_branch
      %84 = sbr.rel (0) target = $region25
    $region24: #{bilinear_decode.2} parent=1 // pred_region
      _
    $region25: #{bilinear_decode.2} parent=1 // pred_fallthru
      _
    %85 = vsyncpa [#allocation3], 1
    %86 = vsyncpa [#allocation5], 1

// kernel: bilinear_decode.3
$region0: #{bilinear_decode.3}
  #allocation0 [shape = 'u32[]', space=smem, size = 0x4, offset = 0x4, fixed_abs, tag = 'smem constant byte address 0x4 - core index']
  #allocation1 [shape = 'u32[72,128]{1,0:T(1,128)}', space=vmem, size = 0x9000, scoped, tag = 'internal scratch']
  %s0 = inlined_call_operand.vmem [shape: f32[16,32], index: 0, kind: input, shape index: {}]
  %s1 = inlined_call_operand.hbm [shape: f32[16,32], index: 1, kind: input, shape index: {}]
  %s2 = inlined_call_operand.hbm [shape: f32[16,16], index: 2, kind: output, shape index: {}]
  %s3 = sld [smem:[#allocation0]]
  $region22: #{bilinear_decode.3} parent=0
    _
  %s5 = ssub.s32 1, %s3
  %s6 = scalar_select 0, %s5, %s3
  $region1: #{bilinear_decode.3} parent=0
    #allocation2 [shape = 'u8[8192]{0}', space=vmem, size = 0x2000, scoped, tag = 'input window, operand 1, single buffered']
    #allocation3 [shape = 's32[1]{0}', space=sflag, size = 0x4, scoped, tag = 'scoped memory for bilinear_decode.3']
    #allocation4 [shape = 's32[1]{0}', space=sflag, size = 0x4, scoped, tag = 'scoped memory for bilinear_decode.3']
    #allocation5 [shape = 'u8[8192]{0}', space=vmem, size = 0x2000, scoped, tag = 'output window, operand 0, single buffered']
    %7 = vsyncpa [#allocation3], 0
    %8 = vsyncpa [#allocation4], 0
    // Predicated region
    $region2: #{bilinear_decode.3} parent=1 // pred_check
      _
    $region3: #{bilinear_decode.3} parent=1 // pred_check_branch
      %10 = sbr.rel (0) target = $region5
    $region4: #{bilinear_decode.3} parent=1 // pred_region
      _
    $region5: #{bilinear_decode.3} parent=1 // pred_fallthru
      _
    // Predicated region
    $region6: #{bilinear_decode.3} parent=1 // pred_check
      _
    $region7: #{bilinear_decode.3} parent=1 // pred_check_branch
      %12 = sbr.rel (0) target = $region9
    $region8: #{bilinear_decode.3} parent=1 // pred_region
      %14 = vsyncadd [#allocation3], 0
      %s15 = sshll.u32 %s1, 4
      %s16 = int_to_ptr.hbm [resolvable:$true] %s15
      %s17 = sshll.u32 [#allocation2], 4
      %s18 = int_to_ptr.vmem [resolvable:$true] %s17
      %23 = dma.hbm_to_vmem [thread:$0]  %s16, 256, %s18, [#allocation3], 128, 128, 8
    $region9: #{bilinear_decode.3} parent=1 // pred_fallthru
      _
    // Predicated region
    $region10: #{bilinear_decode.3} parent=1 // pred_check
      _
    $region11: #{bilinear_decode.3} parent=1 // pred_check_branch
      %25 = sbr.rel (0) target = $region13
    $region12: #{bilinear_decode.3} parent=1 // pred_region
      %27 = dma.done [#allocation3], 256
    $region13: #{bilinear_decode.3} parent=1 // pred_fallthru
      _
    %v28 = vld [vmem:[%s0] sm:$0xff]
    %v29 = vld [vmem:[%s0 + $0x8] sm:$0xff]
    %v30 = vld [vmem:[#allocation2] sm:$0xff]
    %v31 = vld [vmem:[#allocation2 + $0x8] sm:$0xff]
    %vm32 = vcmask 261120
    %v34 = vsel %vm32, %v28, 0
    %v37 = vsel %vm32, %v29, 0
    %v40 = vsel %vm32, %v30, 0
    %v43 = vsel %vm32, %v31, 0
    %45 = vmatpush.xpose.msra.mxu0 0.0
    %46 = vmatpush.xpose.msra.mxu0 0.0
    %47 = vmatpush.xpose.msra.mxu0 0.0
    %48 = vmatpush.xpose.msra.mxu0 0.0
    %49 = vmatpush.xpose.msra.mxu0 0.0
    %50 = vmatpush.xpose.msra.mxu0 0.0
    %51 = vmatpush.xpose.msra.mxu0 0.0
    %52 = vmatpush.xpose.msra.mxu0 0.0
    %53 = vmatpush.xpose.msra.mxu0 0.0
    %54 = vmatpush.xpose.msra.mxu0 0.0
    %55 = vmatpush.xpose.msra.mxu0 0.0
    %56 = vmatpush.xpose.msra.mxu0 0.0
    %57 = vmatpush.xpose.msra.mxu0 0.0
    %58 = vmatpush.xpose.msra.mxu0 0.0
    %59 = vmatpush.xpose.msra.mxu0 %v43
    %60 = vmatpush.xpose.msra.mxu0 %v40
    %61 = vmatmul.f32.gmra.mxu0 %v34
    %v62 = vpop.f32.mrf.mxu0
    %v63 = vadd.f32 0.0, %v62
    %64 = vmatmul.f32.gmra.mxu0 %v37
    %v65 = vpop.f32.mrf.mxu0
    %v66 = vadd.f32 0.0, %v65
    %67 = vdwg.mxu0
    %v68 = vxor.u32 %v63, 2147483648
    %v69 = vxor.u32 %v66, 2147483648
    %v70 = vmul.f32 %v68, 1.442695
    %v71 = vpow.pop %v70
    %v72 = vmul.f32 %v69, 1.442695
    %v73 = vpow.pop %v72
    %v74 = vadd.f32 %v71, 1.0
    %v75 = vadd.f32 %v73, 1.0
    %v76 = vrcp.pop %v74
    %v77 = vmul.f32 %v74, %v76
    %v78 = vsub.f32 1.0, %v77
    %v79 = vmul.f32 %v76, %v78
    %v80 = vadd.f32 %v76, %v79
    %vm81 = vweird.f32 %v74
    %vm82 = vweird.f32 %v76
    %vm83 = vmor %vm81, %vm82
    %v84 = vsel %vm83, %v76, %v80
    %v85 = vand.u32 2147483647, %v74
    %vm86 = vcmp.eq.f32.partialorder %v85, 8.507059e+37
    %v87 = vand.u32 %v74, 2147483648
    %v88 = vor.u32 1.1754944e-38, %v87
    %v89 = vsel %vm86, %v88, %v84
    %v90 = vmul.f32 1.0, %v89
    %v91 = vrcp.pop %v75
    %v92 = vmul.f32 %v75, %v91
    %v93 = vsub.f32 1.0, %v92
    %v94 = vmul.f32 %v91, %v93
    %v95 = vadd.f32 %v91, %v94
    %vm96 = vweird.f32 %v75
    %vm97 = vweird.f32 %v91
    %vm98 = vmor %vm96, %vm97
    %v99 = vsel %vm98, %v91, %v95
    %v100 = vand.u32 2147483647, %v75
    %vm101 = vcmp.eq.f32.partialorder %v100, 8.507059e+37
    %v102 = vand.u32 %v75, 2147483648
    %v103 = vor.u32 1.1754944e-38, %v102
    %v104 = vsel %vm101, %v103, %v99
    %v105 = vmul.f32 1.0, %v104
    %vm106 = vcmask 130048
    %107 = vst.msk [vmem:[#allocation5] sm:$0xff] %vm106, %v90
    %108 = vst.msk [vmem:[#allocation5 + $0x8] sm:$0xff] %vm106, %v105
    // Predicated region
    $region14: #{bilinear_decode.3} parent=1 // pred_check
      _
    $region15: #{bilinear_decode.3} parent=1 // pred_check_branch
      %110 = sbr.rel (0) target = $region17
    $region16: #{bilinear_decode.3} parent=1 // pred_region
      %112 = vsyncadd [#allocation4], 0
      %s113 = sshll.u32 [#allocation5], 4
      %s114 = int_to_ptr.vmem [resolvable:$true] %s113
      %s115 = sshll.u32 %s2, 4
      %s116 = int_to_ptr.hbm [resolvable:$true] %s115
      %121 = dma.vmem_to_hbm [thread:$0]  %s114, 256, %s116, [#allocation4], 128, 128, 8
    $region17: #{bilinear_decode.3} parent=1 // pred_fallthru
      _
    // Predicated region
    $region18: #{bilinear_decode.3} parent=1 // pred_check
      _
    $region19: #{bilinear_decode.3} parent=1 // pred_check_branch
      %123 = sbr.rel (0) target = $region21
    $region20: #{bilinear_decode.3} parent=1 // pred_region
      %125 = dma.done [#allocation4], 256
    $region21: #{bilinear_decode.3} parent=1 // pred_fallthru
      _
    %126 = vsyncpa [#allocation3], 1
    %127 = vsyncpa [#allocation4], 1

</llo_original>
